<compile_context>
chip_gen: v7x
topology: tpu7x:2x2x1
jax: 0.10.0
libtpu: 0.0.40
codegen_flags: <defaults>
</compile_context>

<pallas_src>
import functools

import jax
import jax.numpy as jnp
from jax import lax
from jax.experimental import pallas as pl
from jax.experimental.pallas import tpu as pltpu

KSIZE = 3          # module default; reflect pad = (KSIZE - 1) // 2 = 1
PAD = (KSIZE - 1) // 2


# --------------------------------------------------------------------------- #
# In-kernel helpers (shared by the fused kernel and the tiled 3-stage path).  #
# --------------------------------------------------------------------------- #

def _channel_sum_max(x_ref, C, slab):
    """Sum and max over the channel axis of a (C, T) ref -> two (1, T) f32 maps.

    Channels are streamed in sublane-aligned slabs of `slab` rows; one final
    cross-sublane reduce collapses the (slab, T) accumulators.
    """
    if C <= slab:
        xs = x_ref[...].astype(jnp.float32)
        return (jnp.sum(xs, axis=0, keepdims=True),
                jnp.max(xs, axis=0, keepdims=True))

    n_full = C // slab

    def body(k, carry):
        acc_s, acc_m = carry
        c0 = pl.multiple_of(k * slab, slab)
        sl = x_ref[pl.ds(c0, slab), :].astype(jnp.float32)
        return acc_s + sl, jnp.maximum(acc_m, sl)

    sl0 = x_ref[pl.ds(0, slab), :].astype(jnp.float32)
    acc_s, acc_m = lax.fori_loop(1, n_full, body, (sl0, sl0),
                                 unroll=n_full <= 8)
    sum_map = jnp.sum(acc_s, axis=0, keepdims=True)
    max_map = jnp.max(acc_m, axis=0, keepdims=True)

    rem = C % slab
    if rem:
        tail = x_ref[pl.ds(n_full * slab, rem), :].astype(jnp.float32)
        sum_map = sum_map + jnp.sum(tail, axis=0, keepdims=True)
        max_map = jnp.maximum(max_map, jnp.max(tail, axis=0, keepdims=True))
    return sum_map, max_map


def _reflect_conv3x3_sigmoid(wb_ref, jcol, sum_map, max_map, H, W):
    """3x3 reflect-padded conv over [sum*(w/C), max] + bias, then sigmoid.

    Runs directly in the flat (1, H*W) layout with lane rotations and
    iota/column-map boundary fixups (no (H+2, W+2) intermediate).
    wb_ref: SMEM (19,) = [w_avg(9, prescaled by 1/C), w_max(9), bias].
    """
    HW = H * W

    def _roll(m, k):
        k = k % HW                      # static, non-negative shift
        if k == 0:
            return m
        return pltpu.roll(m, k, axis=1)  # result[p] = m[p - k mod HW]

    flat = lax.broadcasted_iota(jnp.int32, (1, HW), 1)
    at_l = jcol == 0            # j == 0
    at_r = jcol == (W - 1)      # j == W-1
    at_t = flat < W             # i == 0
    at_b = flat >= (HW - W)     # i == H-1

    def conv_accumulate(m, w_base, acc):
        mm1 = _roll(m, 1)       # M[i, j-1]  (circular; fixed at boundaries)
        mp1 = _roll(m, -1)      # M[i, j+1]
        cols = (jnp.where(at_l, mp1, mm1),   # dj=0: col j-1, reflect at left
                m,                           # dj=1: col j
                jnp.where(at_r, mm1, mp1))   # dj=2: col j+1, reflect at right
        for dj, cmap in enumerate(cols):
            up = _roll(cmap, W)     # row i-1 (circular)
            dn = _roll(cmap, -W)    # row i+1 (circular)
            acc = acc + wb_ref[w_base + dj] * jnp.where(at_t, dn, up)      # di=0
            acc = acc + wb_ref[w_base + 3 + dj] * cmap                     # di=1
            acc = acc + wb_ref[w_base + 6 + dj] * jnp.where(at_b, up, dn)  # di=2
        return acc

    acc = jnp.full((1, HW), wb_ref[18], dtype=jnp.float32)   # bias
    acc = conv_accumulate(sum_map, 0, acc)   # avg channel (1/C in the weights)
    acc = conv_accumulate(max_map, 9, acc)   # max channel
    return jax.nn.sigmoid(acc)


def _apply_gate(x_ref, o_ref, s, C, slab, mul_dtype):
    """o = x * s, streaming channels in sublane-aligned slabs."""
    T = s.shape[-1]
    n_full = C // slab
    rem = C % slab
    h = slab if n_full > 0 else rem
    # Hoisted once: JAX does not CSE broadcast_in_dim inside the loop.
    s_slab = jnp.broadcast_to(s, (h, T)).astype(mul_dtype)

    if n_full > 0:
        @pl.loop(0, n_full, unroll=n_full <= 8)
        def _(k):
            c0 = pl.multiple_of(k * slab, slab)
            xs = x_ref[pl.ds(c0, slab), :].astype(mul_dtype)
            o_ref[pl.ds(c0, slab), :] = (xs * s_slab).astype(o_ref.dtype)
    if rem:
        c0 = n_full * slab
        xs = x_ref[pl.ds(c0, rem), :].astype(mul_dtype)
        o_ref[pl.ds(c0, rem), :] = (xs * s_slab[:rem, :]).astype(o_ref.dtype)


# --------------------------------------------------------------------------- #
# Kernels                                                                     #
# --------------------------------------------------------------------------- #

def _sa_fused_kernel(wb_ref, col_ref, x_ref, o_ref, *, C, H, W, slab, mul_dtype):
    sum_map, max_map = _channel_sum_max(x_ref, C, slab)
    s = _reflect_conv3x3_sigmoid(wb_ref, col_ref[...], sum_map, max_map, H, W)
    _apply_gate(x_ref, o_ref, s, C, slab, mul_dtype)


def _sa_reduce_kernel(x_ref, red_ref, *, C, slab):
    sum_map, max_map = _channel_sum_max(x_ref, C, slab)
    red_ref[pl.ds(0, 1), :] = sum_map
    red_ref[pl.ds(1, 1), :] = max_map


def _sa_conv_kernel(wb_ref, col_ref, red_ref, s_ref, *, H, W):
    sum_map = red_ref[pl.ds(0, 1), :]
    max_map = red_ref[pl.ds(1, 1), :]
    s_ref[...] = _reflect_conv3x3_sigmoid(wb_ref, col_ref[...],
                                          sum_map, max_map, H, W)


def _sa_gate_kernel(x_ref, s_ref, o_ref, *, C, slab, mul_dtype):
    _apply_gate(x_ref, o_ref, s_ref[...], C, slab, mul_dtype)


# --------------------------------------------------------------------------- #
# Host-side sizing helpers                                                    #
# --------------------------------------------------------------------------- #

def _tpu_vmem_budget_bytes():
    """<= 3/4 of physical per-core VMEM (48 MiB on v7x, 96 MiB on v5e/v6e)."""
    cap = 64 << 20   # conservative default (v7x per-TensorCore VMEM)
    try:
        info = pltpu.get_tpu_info()
        for name in ("vmem_capacity_bytes", "vmem_size_bytes", "vmem_bytes"):
            val = getattr(info, name, None)
            if val:
                cap = int(val)
                break
    except Exception:
        pass
    return min(96 << 20, (3 * cap) // 4)


def _vmem_limit_bytes(block_bytes, hw, budget):
    # Double-buffer every input *and* output block, plus headroom for the flat
    # (1, HW) conv temporaries, capped at the per-generation budget.
    need = 2 * block_bytes + 64 * hw + (2 << 20)
    return int(min(budget, max(32 << 20, need)))


def _mul_dtype_for(x_dtype):
    """bf16 gating multiply only on chips with a bf16 VALU (v6e / v7x)."""
    if jnp.dtype(x_dtype) == jnp.dtype(jnp.bfloat16):
        try:
            kind = jax.devices()[0].device_kind.lower()
        except Exception:
            kind = ""
        if any(v in kind for v in ("v2", "v3", "v4", "v5")):
            return jnp.float32          # no bf16 VALU -> compute in f32
        return jnp.bfloat16
    return jnp.float32


def _pick_spatial_tile(HW, C, itemsize, target_bytes):
    """Largest multiple of 128 dividing HW with C*t*itemsize <= target."""
    best = 128
    t = 128
    while t <= HW:
        if HW % t == 0 and C * t * itemsize <= target_bytes:
            best = t
        t += 128
    return best


# --------------------------------------------------------------------------- #
# Public wrapper                                                              #
# --------------------------------------------------------------------------- #

def spatial_attention(x, weight, bias, *, force_path=None,
                      tile_target_bytes=2 << 20,
                      fused_threshold_bytes=8 << 20):
    """x: (B, C, H, W); weight: (1, 2, 3, 3); bias: (1,). Returns (B, C, H, W).

    force_path: None (auto) | "fused" | "tiled"  (testing / tuning knob).
    """
    B, C, H, W = x.shape
    assert H >= 2 and W >= 2, "reflect pad=1 requires H, W >= 2 (as in PyTorch)"
    HW = H * W
    itemsize = jnp.dtype(x.dtype).itemsize

    # Fold mean's 1/C into the avg-channel weights; flatten weights+bias to 1-D.
    w = weight.astype(jnp.float32)[0]                  # (2, 3, 3)
    w = w.at[0].multiply(1.0 / C)
    wb = jnp.concatenate([w.reshape(-1),
                          bias.astype(jnp.float32).reshape(-1)])   # (19,)

    # Host-precomputed column-index map (avoids in-kernel vector int mod).
    colmap = (jnp.arange(HW, dtype=jnp.int32) % W).reshape(1, HW)

    x_flat = x.reshape(B, C, HW)                       # lane-dense layout

    mul_dtype = _mul_dtype_for(x.dtype)
    slab = 8 * max(1, 4 // itemsize)                   # 8 rows f32, 16 rows bf16
    budget = _tpu_vmem_budget_bytes()

    fused_block_bytes = 2 * C * HW * itemsize + HW * 4          # x + out + col
    fused_fits = (2 * fused_block_bytes + 64 * HW + (2 << 20)) <= budget
    can_tile = (HW % 128 == 0)

    if force_path == "fused":
        use_tiled = False
    elif force_path == "tiled":
        use_tiled = can_tile
    else:
        # Tiled pipeline when the fused block does not fit the VMEM budget, or
        # when B == 1 and the map is large (pipelining + both v7x TensorCores).
        use_tiled = can_tile and (
            (not fused_fits)
            or (B == 1 and fused_block_bytes > fused_threshold_bytes))

    if not use_tiled:
        # ---------------- single-pass fused kernel, grid over batch ----------
        kernel = functools.partial(_sa_fused_kernel, C=C, H=H, W=W,
                                   slab=slab, mul_dtype=mul_dtype)
        cost = pl.CostEstimate(
            flops=int(B * (3 * C * HW + 36 * HW)),
            transcendentals=int(B * HW),
            bytes_accessed=int(2 * B * C * HW * itemsize + HW * 4 + 19 * 4))
        out_flat = pl.pallas_call(
            kernel,
            out_shape=jax.ShapeDtypeStruct((B, C, HW), x.dtype),
            grid_spec=pltpu.PrefetchScalarGridSpec(
                num_scalar_prefetch=0,
                grid=(B,),
                in_specs=[
                    pl.BlockSpec(memory_space=pltpu.MemorySpace.SMEM),   # wb
                    pl.BlockSpec((1, HW), lambda b: (0, 0)),             # colmap
                    pl.BlockSpec((None, C, HW), lambda b: (b, 0, 0)),    # x
                ],
                out_specs=pl.BlockSpec((None, C, HW), lambda b: (b, 0, 0)),
            ),
            compiler_params=pltpu.CompilerParams(
                dimension_semantics=("parallel",),
                vmem_limit_bytes=_vmem_limit_bytes(fused_block_bytes, HW, budget)),
            cost_estimate=cost,
        )(wb, colmap, x_flat)
        return out_flat.reshape(B, C, H, W)

    # ---------------- tiled 3-stage pipeline ---------------------------------
    thw = _pick_spatial_tile(HW, C, itemsize, tile_target_bytes)
    n_t = HW // thw

    # Stage A: per-tile channel sum / max  ->  (B, 2, HW) f32
    red_kernel = functools.partial(_sa_reduce_kernel, C=C, slab=slab)
    red_block_bytes = C * thw * itemsize + 2 * thw * 4
    red = pl.pallas_call(
        red_kernel,
        out_shape=jax.ShapeDtypeStruct((B, 2, HW), jnp.float32),
        grid_spec=pltpu.PrefetchScalarGridSpec(
            num_scalar_prefetch=0,
            grid=(B, n_t),
            in_specs=[pl.BlockSpec((None, C, thw), lambda b, t: (b, 0, t))],
            out_specs=pl.BlockSpec((None, 2, thw), lambda b, t: (b, 0, t)),
        ),
        compiler_params=pltpu.CompilerParams(
            dimension_semantics=("parallel", "parallel"),
            vmem_limit_bytes=_vmem_limit_bytes(red_block_bytes, thw, budget)),
        cost_estimate=pl.CostEstimate(
            flops=int(2 * B * C * HW), transcendentals=0,
            bytes_accessed=int(B * C * HW * itemsize + B * 2 * HW * 4)),
    )(x_flat)

    # Stage B: 3x3 reflect conv + sigmoid on the (2, HW) map -> (B, 1, HW) f32
    # TODO(synk): row-tile this stage too for extremely large H*W maps.
    conv_kernel = functools.partial(_sa_conv_kernel, H=H, W=W)
    conv_block_bytes = 4 * HW * 4
    smap = pl.pallas_call(
        conv_kernel,
        out_shape=jax.ShapeDtypeStruct((B, 1, HW), jnp.float32),
        grid_spec=pltpu.PrefetchScalarGridSpec(
            num_scalar_prefetch=0,
            grid=(B,),
            in_specs=[
                pl.BlockSpec(memory_space=pltpu.MemorySpace.SMEM),        # wb
                pl.BlockSpec((1, HW), lambda b: (0, 0)),                  # colmap
                pl.BlockSpec((None, 2, HW), lambda b: (b, 0, 0)),         # red
            ],
            out_specs=pl.BlockSpec((None, 1, HW), lambda b: (b, 0, 0)),
        ),
        compiler_params=pltpu.CompilerParams(
            dimension_semantics=("parallel",),
            vmem_limit_bytes=_vmem_limit_bytes(conv_block_bytes, HW, budget)),
        cost_estimate=pl.CostEstimate(
            flops=int(40 * B * HW), transcendentals=int(B * HW),
            bytes_accessed=int(B * 3 * HW * 4 + HW * 4 + 19 * 4)),
    )(wb, colmap, red)

    # Stage C: out = x * s, per spatial tile
    gate_kernel = functools.partial(_sa_gate_kernel, C=C, slab=slab,
                                    mul_dtype=mul_dtype)
    gate_block_bytes = 2 * C * thw * itemsize + thw * 4
    out_flat = pl.pallas_call(
        gate_kernel,
        out_shape=jax.ShapeDtypeStruct((B, C, HW), x.dtype),
        grid_spec=pltpu.PrefetchScalarGridSpec(
            num_scalar_prefetch=0,
            grid=(B, n_t),
            in_specs=[
                pl.BlockSpec((None, C, thw), lambda b, t: (b, 0, t)),     # x
                pl.BlockSpec((None, 1, thw), lambda b, t: (b, 0, t)),     # s
            ],
            out_specs=pl.BlockSpec((None, C, thw), lambda b, t: (b, 0, t)),
        ),
        compiler_params=pltpu.CompilerParams(
            dimension_semantics=("parallel", "parallel"),
            vmem_limit_bytes=_vmem_limit_bytes(gate_block_bytes, thw, budget)),
        cost_estimate=pl.CostEstimate(
            flops=int(B * C * HW), transcendentals=0,
            bytes_accessed=int(2 * B * C * HW * itemsize + B * HW * 4)),
    )(x_flat, smap)

    return out_flat.reshape(B, C, H, W)


def spatial_attention_ref(x, weight, bias):
    """Plain-JAX reference mirroring the PyTorch forward."""
    avgpool = jnp.mean(x, axis=1, keepdims=True)
    maxpool = jnp.max(x, axis=1, keepdims=True)
    s = jnp.concatenate([avgpool, maxpool], axis=1)          # (B, 2, H, W)
    s = jnp.pad(s, ((0, 0), (0, 0), (PAD, PAD), (PAD, PAD)), mode="reflect")
    s = jax.lax.conv_general_dilated(
        s, weight, window_strides=(1, 1), padding="VALID",
        dimension_numbers=("NCHW", "OIHW", "NCHW"))
    s = s + bias[None, :, None, None]
    s = jax.nn.sigmoid(s)
    return x * s


if __name__ == "__main__":
    key = jax.random.PRNGKey(0)
    kx, kw, kb, kx2 = jax.random.split(key, 4)

    # Conv2d(2, 1, 3): weight (1, 2, 3, 3), bias (1,)
    # xavier_normal_: std = sqrt(2 / (fan_in + fan_out)) = sqrt(2 / (18 + 9))
    xavier_std = (2.0 / (2 * KSIZE * KSIZE + 1 * KSIZE * KSIZE)) ** 0.5
    weight = xavier_std * jax.random.normal(kw, (1, 2, KSIZE, KSIZE),
                                            dtype=jnp.float32)
    bound = 1.0 / (2 * KSIZE * KSIZE) ** 0.5
    bias = jax.random.uniform(kb, (1,), minval=-bound, maxval=bound,
                              dtype=jnp.float32)

    # Case 1: module-default small shape; exercises the fused single-pass path
    # and (forced, with tiny tiles) the tiled 3-stage path.
    B, C, H, W = 2, 4, 16, 16
    x = jax.random.normal(kx, (B, C, H, W), dtype=jnp.float32)
    ref = spatial_attention_ref(x, weight, bias)

    out = jax.block_until_ready(spatial_attention(x, weight, bias))
    assert out.shape == (B, C, H, W)
    assert jnp.allclose(out, ref, atol=2e-5, rtol=2e-5), "fused path mismatch"

    out_t = jax.block_until_ready(
        spatial_attention(x, weight, bias, force_path="tiled",
                          tile_target_bytes=2048))
    assert jnp.allclose(out_t, ref, atol=2e-5, rtol=2e-5), "tiled path mismatch"

    # Case 2: C > slab (exercises the 8-row slab loop + channel tail), B == 1.
    B2, C2, H2, W2 = 1, 20, 8, 32
    x2 = jax.random.normal(kx2, (B2, C2, H2, W2), dtype=jnp.float32)
    ref2 = spatial_attention_ref(x2, weight, bias)
    out2 = jax.block_until_ready(
        spatial_attention(x2, weight, bias, force_path="fused"))
    out2_t = jax.block_until_ready(
        spatial_attention(x2, weight, bias, force_path="tiled",
                          tile_target_bytes=2048))
    assert jnp.allclose(out2, ref2, atol=2e-5, rtol=2e-5), "fused mismatch (2)"
    assert jnp.allclose(out2_t, ref2, atol=2e-5, rtol=2e-5), "tiled mismatch (2)"

    print("KERNEL_OK")
</pallas_src>

<mosaic_0001>
module attributes {stable_mosaic.version = 11 : i64} {
  func.func @_sa_fused_kernel(%arg0: i32, %arg1: memref<19xf32, #tpu.memory_space<smem>>, %arg2: memref<1x256xi32, #tpu.memory_space<vmem>>, %arg3: memref<1x4x256xf32, #tpu.memory_space<vmem>>, %arg4: memref<1x4x256xf32, #tpu.memory_space<vmem>>) attributes {dimension_semantics = [#tpu.dimension_semantics<parallel>], iteration_bounds = array<i64: 2>, scalar_prefetch = 0 : i64, scratch_operands = 0 : i64, tpu.core_type = #tpu.core_type<tc>, window_params = [{transform_indices = @transform_0, window_bounds = array<i64: 19>}, {pipeline_mode = #tpu.pipeline_mode<synchronous>, transform_indices = @transform_1, window_bounds = array<i64: 1, 256>}, {transform_indices = @transform_2, window_bounds = array<i64: 1, 4, 256>}, {transform_indices = @transform_3, window_bounds = array<i64: 1, 4, 256>}]} {
    %c0 = arith.constant 0 : index
    %c0_0 = arith.constant 0 : index
    %c0_1 = arith.constant 0 : index
    %0 = vector.load %arg3[%c0, %c0_0, %c0_1] : memref<1x4x256xf32, #tpu.memory_space<vmem>>, vector<1x4x256xf32>
    %1 = vector.shape_cast %0 : vector<1x4x256xf32> to vector<4x256xf32>
    %cst = arith.constant dense<0.000000e+00> : vector<256xf32>
    %2 = vector.multi_reduction <add>, %1, %cst [0] : vector<4x256xf32> to vector<256xf32>
    %3 = vector.shape_cast %2 : vector<256xf32> to vector<1x256xf32>
    %cst_2 = arith.constant dense<0xFF800000> : vector<256xf32>
    %4 = vector.multi_reduction <maximumf>, %1, %cst_2 [0] : vector<4x256xf32> to vector<256xf32>
    %5 = vector.shape_cast %4 : vector<256xf32> to vector<1x256xf32>
    %c0_3 = arith.constant 0 : index
    %c0_4 = arith.constant 0 : index
    %6 = vector.load %arg2[%c0_3, %c0_4] : memref<1x256xi32, #tpu.memory_space<vmem>>, vector<1x256xi32>
    %7 = tpu.iota {dimensions = array<i32: 1>} : vector<1x256xi32>
    %c0_i32 = arith.constant 0 : i32
    %8 = vector.broadcast %c0_i32 : i32 to vector<1x256xi32>
    %9 = arith.cmpi eq, %6, %8 : vector<1x256xi32>
    %c15_i32 = arith.constant 15 : i32
    %10 = vector.broadcast %c15_i32 : i32 to vector<1x256xi32>
    %11 = arith.cmpi eq, %6, %10 : vector<1x256xi32>
    %c16_i32 = arith.constant 16 : i32
    %12 = vector.broadcast %c16_i32 : i32 to vector<1x256xi32>
    %13 = arith.cmpi slt, %7, %12 : vector<1x256xi32>
    %c240_i32 = arith.constant 240 : i32
    %14 = vector.broadcast %c240_i32 : i32 to vector<1x256xi32>
    %15 = arith.cmpi sge, %7, %14 : vector<1x256xi32>
    %c18 = arith.constant 18 : index
    %16 = memref.load %arg1[%c18] : memref<19xf32, #tpu.memory_space<smem>>
    %17 = vector.broadcast %16 : f32 to vector<1x256xf32>
    %c1_i32 = arith.constant 1 : i32
    %18 = tpu.dynamic_rotate %3 by %c1_i32 dim 1 : vector<1x256xf32>, i32 -> vector<1x256xf32>
    %c255_i32 = arith.constant 255 : i32
    %19 = tpu.dynamic_rotate %3 by %c255_i32 dim 1 : vector<1x256xf32>, i32 -> vector<1x256xf32>
    %20 = arith.select %9, %19, %18 : vector<1x256xi1>, vector<1x256xf32>
    %21 = arith.select %11, %18, %19 : vector<1x256xi1>, vector<1x256xf32>
    %c16_i32_5 = arith.constant 16 : i32
    %22 = tpu.dynamic_rotate %20 by %c16_i32_5 dim 1 : vector<1x256xf32>, i32 -> vector<1x256xf32>
    %c240_i32_6 = arith.constant 240 : i32
    %23 = tpu.dynamic_rotate %20 by %c240_i32_6 dim 1 : vector<1x256xf32>, i32 -> vector<1x256xf32>
    %c0_7 = arith.constant 0 : index
    %24 = memref.load %arg1[%c0_7] : memref<19xf32, #tpu.memory_space<smem>>
    %25 = arith.select %13, %23, %22 : vector<1x256xi1>, vector<1x256xf32>
    %26 = vector.broadcast %24 : f32 to vector<1x256xf32>
    %27 = arith.mulf %26, %25 : vector<1x256xf32>
    %28 = arith.addf %17, %27 : vector<1x256xf32>
    %c3 = arith.constant 3 : index
    %29 = memref.load %arg1[%c3] : memref<19xf32, #tpu.memory_space<smem>>
    %30 = vector.broadcast %29 : f32 to vector<1x256xf32>
    %31 = arith.mulf %30, %20 : vector<1x256xf32>
    %32 = arith.addf %28, %31 : vector<1x256xf32>
    %c6 = arith.constant 6 : index
    %33 = memref.load %arg1[%c6] : memref<19xf32, #tpu.memory_space<smem>>
    %34 = arith.select %15, %22, %23 : vector<1x256xi1>, vector<1x256xf32>
    %35 = vector.broadcast %33 : f32 to vector<1x256xf32>
    %36 = arith.mulf %35, %34 : vector<1x256xf32>
    %37 = arith.addf %32, %36 : vector<1x256xf32>
    %c16_i32_8 = arith.constant 16 : i32
    %38 = tpu.dynamic_rotate %3 by %c16_i32_8 dim 1 : vector<1x256xf32>, i32 -> vector<1x256xf32>
    %c240_i32_9 = arith.constant 240 : i32
    %39 = tpu.dynamic_rotate %3 by %c240_i32_9 dim 1 : vector<1x256xf32>, i32 -> vector<1x256xf32>
    %c1 = arith.constant 1 : index
    %40 = memref.load %arg1[%c1] : memref<19xf32, #tpu.memory_space<smem>>
    %41 = arith.select %13, %39, %38 : vector<1x256xi1>, vector<1x256xf32>
    %42 = vector.broadcast %40 : f32 to vector<1x256xf32>
    %43 = arith.mulf %42, %41 : vector<1x256xf32>
    %44 = arith.addf %37, %43 : vector<1x256xf32>
    %c4 = arith.constant 4 : index
    %45 = memref.load %arg1[%c4] : memref<19xf32, #tpu.memory_space<smem>>
    %46 = vector.broadcast %45 : f32 to vector<1x256xf32>
    %47 = arith.mulf %46, %3 : vector<1x256xf32>
    %48 = arith.addf %44, %47 : vector<1x256xf32>
    %c7 = arith.constant 7 : index
    %49 = memref.load %arg1[%c7] : memref<19xf32, #tpu.memory_space<smem>>
    %50 = arith.select %15, %38, %39 : vector<1x256xi1>, vector<1x256xf32>
    %51 = vector.broadcast %49 : f32 to vector<1x256xf32>
    %52 = arith.mulf %51, %50 : vector<1x256xf32>
    %53 = arith.addf %48, %52 : vector<1x256xf32>
    %c16_i32_10 = arith.constant 16 : i32
    %54 = tpu.dynamic_rotate %21 by %c16_i32_10 dim 1 : vector<1x256xf32>, i32 -> vector<1x256xf32>
    %c240_i32_11 = arith.constant 240 : i32
    %55 = tpu.dynamic_rotate %21 by %c240_i32_11 dim 1 : vector<1x256xf32>, i32 -> vector<1x256xf32>
    %c2 = arith.constant 2 : index
    %56 = memref.load %arg1[%c2] : memref<19xf32, #tpu.memory_space<smem>>
    %57 = arith.select %13, %55, %54 : vector<1x256xi1>, vector<1x256xf32>
    %58 = vector.broadcast %56 : f32 to vector<1x256xf32>
    %59 = arith.mulf %58, %57 : vector<1x256xf32>
    %60 = arith.addf %53, %59 : vector<1x256xf32>
    %c5 = arith.constant 5 : index
    %61 = memref.load %arg1[%c5] : memref<19xf32, #tpu.memory_space<smem>>
    %62 = vector.broadcast %61 : f32 to vector<1x256xf32>
    %63 = arith.mulf %62, %21 : vector<1x256xf32>
    %64 = arith.addf %60, %63 : vector<1x256xf32>
    %c8 = arith.constant 8 : index
    %65 = memref.load %arg1[%c8] : memref<19xf32, #tpu.memory_space<smem>>
    %66 = arith.select %15, %54, %55 : vector<1x256xi1>, vector<1x256xf32>
    %67 = vector.broadcast %65 : f32 to vector<1x256xf32>
    %68 = arith.mulf %67, %66 : vector<1x256xf32>
    %69 = arith.addf %64, %68 : vector<1x256xf32>
    %c1_i32_12 = arith.constant 1 : i32
    %70 = tpu.dynamic_rotate %5 by %c1_i32_12 dim 1 : vector<1x256xf32>, i32 -> vector<1x256xf32>
    %c255_i32_13 = arith.constant 255 : i32
    %71 = tpu.dynamic_rotate %5 by %c255_i32_13 dim 1 : vector<1x256xf32>, i32 -> vector<1x256xf32>
    %72 = arith.select %9, %71, %70 : vector<1x256xi1>, vector<1x256xf32>
    %73 = arith.select %11, %70, %71 : vector<1x256xi1>, vector<1x256xf32>
    %c16_i32_14 = arith.constant 16 : i32
    %74 = tpu.dynamic_rotate %72 by %c16_i32_14 dim 1 : vector<1x256xf32>, i32 -> vector<1x256xf32>
    %c240_i32_15 = arith.constant 240 : i32
    %75 = tpu.dynamic_rotate %72 by %c240_i32_15 dim 1 : vector<1x256xf32>, i32 -> vector<1x256xf32>
    %c9 = arith.constant 9 : index
    %76 = memref.load %arg1[%c9] : memref<19xf32, #tpu.memory_space<smem>>
    %77 = arith.select %13, %75, %74 : vector<1x256xi1>, vector<1x256xf32>
    %78 = vector.broadcast %76 : f32 to vector<1x256xf32>
    %79 = arith.mulf %78, %77 : vector<1x256xf32>
    %80 = arith.addf %69, %79 : vector<1x256xf32>
    %c12 = arith.constant 12 : index
    %81 = memref.load %arg1[%c12] : memref<19xf32, #tpu.memory_space<smem>>
    %82 = vector.broadcast %81 : f32 to vector<1x256xf32>
    %83 = arith.mulf %82, %72 : vector<1x256xf32>
    %84 = arith.addf %80, %83 : vector<1x256xf32>
    %c15 = arith.constant 15 : index
    %85 = memref.load %arg1[%c15] : memref<19xf32, #tpu.memory_space<smem>>
    %86 = arith.select %15, %74, %75 : vector<1x256xi1>, vector<1x256xf32>
    %87 = vector.broadcast %85 : f32 to vector<1x256xf32>
    %88 = arith.mulf %87, %86 : vector<1x256xf32>
    %89 = arith.addf %84, %88 : vector<1x256xf32>
    %c16_i32_16 = arith.constant 16 : i32
    %90 = tpu.dynamic_rotate %5 by %c16_i32_16 dim 1 : vector<1x256xf32>, i32 -> vector<1x256xf32>
    %c240_i32_17 = arith.constant 240 : i32
    %91 = tpu.dynamic_rotate %5 by %c240_i32_17 dim 1 : vector<1x256xf32>, i32 -> vector<1x256xf32>
    %c10 = arith.constant 10 : index
    %92 = memref.load %arg1[%c10] : memref<19xf32, #tpu.memory_space<smem>>
    %93 = arith.select %13, %91, %90 : vector<1x256xi1>, vector<1x256xf32>
    %94 = vector.broadcast %92 : f32 to vector<1x256xf32>
    %95 = arith.mulf %94, %93 : vector<1x256xf32>
    %96 = arith.addf %89, %95 : vector<1x256xf32>
    %c13 = arith.constant 13 : index
    %97 = memref.load %arg1[%c13] : memref<19xf32, #tpu.memory_space<smem>>
    %98 = vector.broadcast %97 : f32 to vector<1x256xf32>
    %99 = arith.mulf %98, %5 : vector<1x256xf32>
    %100 = arith.addf %96, %99 : vector<1x256xf32>
    %c16 = arith.constant 16 : index
    %101 = memref.load %arg1[%c16] : memref<19xf32, #tpu.memory_space<smem>>
    %102 = arith.select %15, %90, %91 : vector<1x256xi1>, vector<1x256xf32>
    %103 = vector.broadcast %101 : f32 to vector<1x256xf32>
    %104 = arith.mulf %103, %102 : vector<1x256xf32>
    %105 = arith.addf %100, %104 : vector<1x256xf32>
    %c16_i32_18 = arith.constant 16 : i32
    %106 = tpu.dynamic_rotate %73 by %c16_i32_18 dim 1 : vector<1x256xf32>, i32 -> vector<1x256xf32>
    %c240_i32_19 = arith.constant 240 : i32
    %107 = tpu.dynamic_rotate %73 by %c240_i32_19 dim 1 : vector<1x256xf32>, i32 -> vector<1x256xf32>
    %c11 = arith.constant 11 : index
    %108 = memref.load %arg1[%c11] : memref<19xf32, #tpu.memory_space<smem>>
    %109 = arith.select %13, %107, %106 : vector<1x256xi1>, vector<1x256xf32>
    %110 = vector.broadcast %108 : f32 to vector<1x256xf32>
    %111 = arith.mulf %110, %109 : vector<1x256xf32>
    %112 = arith.addf %105, %111 : vector<1x256xf32>
    %c14 = arith.constant 14 : index
    %113 = memref.load %arg1[%c14] : memref<19xf32, #tpu.memory_space<smem>>
    %114 = vector.broadcast %113 : f32 to vector<1x256xf32>
    %115 = arith.mulf %114, %73 : vector<1x256xf32>
    %116 = arith.addf %112, %115 : vector<1x256xf32>
    %c17 = arith.constant 17 : index
    %117 = memref.load %arg1[%c17] : memref<19xf32, #tpu.memory_space<smem>>
    %118 = arith.select %15, %106, %107 : vector<1x256xi1>, vector<1x256xf32>
    %119 = vector.broadcast %117 : f32 to vector<1x256xf32>
    %120 = arith.mulf %119, %118 : vector<1x256xf32>
    %121 = arith.addf %116, %120 : vector<1x256xf32>
    %122 = arith.negf %121 : vector<1x256xf32>
    %123 = math.exp %122 : vector<1x256xf32>
    %cst_20 = arith.constant 1.000000e+00 : f32
    %124 = vector.broadcast %cst_20 : f32 to vector<1x256xf32>
    %125 = arith.addf %124, %123 : vector<1x256xf32>
    %126 = arith.divf %124, %125 : vector<1x256xf32>
    %127 = vector.shape_cast %126 : vector<1x256xf32> to vector<1x256xf32>
    %128 = vector.broadcast %127 : vector<1x256xf32> to vector<4x256xf32>
    %c0_21 = arith.constant 0 : index
    %c0_22 = arith.constant 0 : index
    %c0_23 = arith.constant 0 : index
    %129 = vector.load %arg3[%c0_21, %c0_22, %c0_23] : memref<1x4x256xf32, #tpu.memory_space<vmem>>, vector<1x4x256xf32>
    %130 = vector.shape_cast %129 : vector<1x4x256xf32> to vector<4x256xf32>
    %131 = arith.mulf %130, %128 : vector<4x256xf32>
    %c0_24 = arith.constant 0 : index
    %c0_25 = arith.constant 0 : index
    %c0_26 = arith.constant 0 : index
    %132 = vector.load %arg4[%c0_24, %c0_25, %c0_26] : memref<1x4x256xf32, #tpu.memory_space<vmem>>, vector<1x4x256xf32>
    %133 = vector.shape_cast %132 : vector<1x4x256xf32> to vector<4x256xf32>
    %134 = vector.shape_cast %131 : vector<4x256xf32> to vector<1x4x256xf32>
    tpu.vector_store %arg4[%c0_24, %c0_25, %c0_26], %134 {strides = array<i32>} : memref<1x4x256xf32, #tpu.memory_space<vmem>>, vector<1x4x256xf32>,
    return
  }
  func.func @transform_0(%arg0: i32) -> i32 {
    %c0_i32 = arith.constant 0 : i32
    %c0_i32_0 = arith.constant 0 : i32
    return %c0_i32 : i32
  }
  func.func @transform_1(%arg0: i32) -> (i32, i32) {
    %c0_i32 = arith.constant 0 : i32
    %c0_i32_0 = arith.constant 0 : i32
    %c0_i32_1 = arith.constant 0 : i32
    return %c0_i32, %c0_i32_0 : i32, i32
  }
  func.func @transform_2(%arg0: i32) -> (i32, i32, i32) {
    %c0_i32 = arith.constant 0 : i32
    %c0_i32_0 = arith.constant 0 : i32
    %c0_i32_1 = arith.constant 0 : i32
    return %arg0, %c0_i32, %c0_i32_0 : i32, i32, i32
  }
  func.func @transform_3(%arg0: i32) -> (i32, i32, i32) {
    %c0_i32 = arith.constant 0 : i32
    %c0_i32_0 = arith.constant 0 : i32
    %c0_i32_1 = arith.constant 0 : i32
    return %arg0, %c0_i32, %c0_i32_0 : i32, i32, i32
  }
}

</mosaic_0001>

<llo_original>
// kernel: tpu_custom_call.1
$region0: #{tpu_custom_call.1}
  #allocation0 [shape = 'u32[]', space=smem, size = 0x4, offset = 0x4, fixed_abs, tag = 'smem constant byte address 0x4 - core index']
  #allocation1 [shape = 'u32[144,128]{1,0:T(1,128)}', space=vmem, size = 0x12000, scoped, tag = 'internal scratch']
  %s0 = inlined_call_operand.hbm [shape: f32[19], index: 0, kind: input, shape index: {}]
  %s1 = inlined_call_operand.vmem [shape: s32[1,256], index: 1, kind: input, shape index: {}]
  %s2 = inlined_call_operand.hbm [shape: f32[2,4,256], index: 2, kind: input, shape index: {}]
  %s3 = inlined_call_operand.hbm [shape: f32[2,4,256], index: 3, kind: output, shape index: {}]
  %s4 = sld [smem:[#allocation0]]
  $region53: #{tpu_custom_call.1} parent=0
    _
  %s6 = ssub.s32 1, %s4
  %s7 = scalar_select 0, %s6, %s4
  $region1: #{tpu_custom_call.1} parent=0
    #allocation2 [shape = 'u8[512]{0}', space=smem, size = 0x200, scoped, tag = 'input window, operand 0, single buffered']
    #allocation3 [shape = 's32[2]{0}', space=sflag, size = 0x8, scoped, tag = 'scoped memory for tpu_custom_call.1']
    #allocation4 [shape = 's32[2]{0}', space=sflag, size = 0x8, scoped, tag = 'scoped memory for tpu_custom_call.1']
    #allocation5 [shape = 's32[2]{0}', space=sflag, size = 0x8, scoped, tag = 'scoped memory for tpu_custom_call.1']
    #allocation6 [shape = 'u8[8192]{0}', space=vmem, size = 0x2000, scoped, tag = 'input window, operand 2']
    #allocation7 [shape = 'u8[8192]{0}', space=vmem, size = 0x2000, scoped, tag = 'output window, operand 0']
    %8 = vsyncpa [#allocation5], 0
    %9 = vsyncpa [#allocation3], 0
    %s10 = scalar_lea.sflag [#allocation3], 1
    %11 = vsyncpa %s10, 0
    %12 = vsyncpa [#allocation4], 0
    %s13 = scalar_lea.sflag [#allocation4], 1
    %14 = vsyncpa %s13, 0
    loop: start=0, step=1, limit=4
    $region2: #{tpu_custom_call.1} parent=1 // loop_pre_header
      _
    $region3: #{tpu_custom_call.1} parent=1 // loop_header
      %s16 = sphi 0, %s20
      %p17 = scmp.ge.s32.totalorder %s16, 4
      %s24 = sphi 0, %s24
      %s26 = sphi 0, %s24
      %s27 = sphi 0, %s26
      %s41 = sphi 0, %s27
      %s45 = sphi 0, %s45
      %s47 = sphi 0, %s45
      %s48 = sphi 0, %s47
      %s62 = sphi 0, %s48
      %s68 = sphi 0, %s70
      %s71 = sphi 0, %s68
      %s72 = sphi 0, %s71
      %s88 = sphi 0, %s72
      %s94 = sphi 0, %s96
      %s97 = sphi 0, %s94
      %s98 = sphi 0, %s97
      %s114 = sphi 0, %s98
    $region4: #{tpu_custom_call.1} parent=1 // loop_header_branch
      %19 = sbr.rel (%p17) target = $region8
    $region5: #{tpu_custom_call.1} parent=1 // loop_body
      %s21 = ssub.s32 %s16, 1
      %s22 = ssub.s32 %s16, 2
      %s23 = sadd.s32 %s16, 1
      %s25 = sadd.s32 %s24, 1
      %p28 = scmp.eq.s32.totalorder %s16, 1
      %p29 = scmp.ne.s32.totalorder %s24, %s26
      %p30 = scmp.eq.s32.totalorder %s16, 0
      %p31 = por %p29, %p30
      %p32 = scmp.ne.s32.totalorder %s24, %s26
      %p33 = scmp.eq.s32.totalorder %s21, 1
      %p34 = por %p32, %p33
      %p35 = scmp.ne.s32.totalorder %s26, %s27
      %p36 = scmp.eq.s32.totalorder %s21, 0
      %p37 = por %p35, %p36
      %p38 = scmp.ne.s32.totalorder %s26, %s27
      %p39 = scmp.eq.s32.totalorder %s22, 1
      %p40 = por %p38, %p39
      %p42 = scmp.ne.s32.totalorder %s27, %s41
      %p43 = scmp.eq.s32.totalorder %s22, 0
      %p44 = por %p42, %p43
      %s46 = sadd.s32 %s45, 1
      %p49 = scmp.eq.s32.totalorder %s16, 1
      %p50 = scmp.ne.s32.totalorder %s45, %s47
      %p51 = scmp.eq.s32.totalorder %s16, 0
      %p52 = por %p50, %p51
      %p53 = scmp.ne.s32.totalorder %s45, %s47
      %p54 = scmp.eq.s32.totalorder %s21, 1
      %p55 = por %p53, %p54
      %p56 = scmp.ne.s32.totalorder %s47, %s48
      %p57 = scmp.eq.s32.totalorder %s21, 0
      %p58 = por %p56, %p57
      %p59 = scmp.ne.s32.totalorder %s47, %s48
      %p60 = scmp.eq.s32.totalorder %s22, 1
      %p61 = por %p59, %p60
      %p63 = scmp.ne.s32.totalorder %s48, %s62
      %p64 = scmp.eq.s32.totalorder %s22, 0
      %p65 = por %p63, %p64
      %s66 = ssub.s32 %s16, %s23
      %p67 = scmp.eq.s32.totalorder %s66, 0
      %s69 = sadd.s32 %s68, 1
      %s70 = scalar_select %p67, %s68, %s69
      %p73 = pneg %p67
      %p74 = scmp.eq.s32.totalorder %s16, 1
      %p75 = por %p73, %p74
      %p76 = scmp.ne.s32.totalorder %s68, %s71
      %p77 = scmp.eq.s32.totalorder %s16, 0
      %p78 = por %p76, %p77
      %p79 = scmp.ne.s32.totalorder %s68, %s71
      %p80 = scmp.eq.s32.totalorder %s21, 1
      %p81 = por %p79, %p80
      %p82 = scmp.ne.s32.totalorder %s71, %s72
      %p83 = scmp.eq.s32.totalorder %s21, 0
      %p84 = por %p82, %p83
      %p85 = scmp.ne.s32.totalorder %s71, %s72
      %p86 = scmp.eq.s32.totalorder %s22, 1
      %p87 = por %p85, %p86
      %p89 = scmp.ne.s32.totalorder %s72, %s88
      %p90 = scmp.eq.s32.totalorder %s22, 0
      %p91 = por %p89, %p90
      %s92 = ssub.s32 %s16, %s23
      %p93 = scmp.eq.s32.totalorder %s92, 0
      %s95 = sadd.s32 %s94, 1
      %s96 = scalar_select %p93, %s94, %s95
      %p99 = pneg %p93
      %p100 = scmp.eq.s32.totalorder %s16, 1
      %p101 = por %p99, %p100
      %p102 = scmp.ne.s32.totalorder %s94, %s97
      %p103 = scmp.eq.s32.totalorder %s16, 0
      %p104 = por %p102, %p103
      %p105 = scmp.ne.s32.totalorder %s94, %s97
      %p106 = scmp.eq.s32.totalorder %s21, 1
      %p107 = por %p105, %p106
      %p108 = scmp.ne.s32.totalorder %s97, %s98
      %p109 = scmp.eq.s32.totalorder %s21, 0
      %p110 = por %p108, %p109
      %p111 = scmp.ne.s32.totalorder %s97, %s98
      %p112 = scmp.eq.s32.totalorder %s22, 1
      %p113 = por %p111, %p112
      %p115 = scmp.ne.s32.totalorder %s98, %s114
      %p116 = scmp.eq.s32.totalorder %s22, 0
      %p117 = por %p115, %p116
      %p118 = scmp.le.s32.totalorder 1, %s16
      %p119 = scmp.lt.s32.totalorder %s16, 3
      %p120 = pnand %p118, %p119
      %p121 = pneg %p120
      // Predicated region
      $region9: #{tpu_custom_call.1} parent=5 // pred_check
        _
      $region10: #{tpu_custom_call.1} parent=5 // pred_check_branch
        %123 = sbr.rel (%p120) target = $region12
      $region11: #{tpu_custom_call.1} parent=5 // pred_region
        %s124 = ssub.s32 %s16, 1
        // Predicated region
        $region13: #{tpu_custom_call.1} parent=11 // pred_check
          %p125 = pneg %p37
        $region14: #{tpu_custom_call.1} parent=11 // pred_check_branch
          %127 = sbr.rel (%p125) target = $region16
        $region15: #{tpu_custom_call.1} parent=11 // pred_region
          %s129 = ssub.s32 16, 16
          %130 = vsyncadd [#allocation5], %s129
          %133 = dma.hbm_to_smem %s0, 16, [#allocation2], [#allocation5]
        $region16: #{tpu_custom_call.1} parent=11 // pred_fallthru
          _
        // Predicated region
        $region17: #{tpu_custom_call.1} parent=11 // pred_check
          %p134 = pneg %p58
        $region18: #{tpu_custom_call.1} parent=11 // pred_check_branch
          %136 = sbr.rel (%p134) target = $region20
        $region19: #{tpu_custom_call.1} parent=11 // pred_region
          _
        $region20: #{tpu_custom_call.1} parent=11 // pred_fallthru
          _
      $region12: #{tpu_custom_call.1} parent=5 // pred_fallthru
        _
      %p137 = scmp.lt.s32.totalorder %s16, 2
      // Predicated region
      $region21: #{tpu_custom_call.1} parent=5 // pred_check
        %p138 = pneg %p137
      $region22: #{tpu_custom_call.1} parent=5 // pred_check_branch
        %140 = sbr.rel (%p138) target = $region24
      $region23: #{tpu_custom_call.1} parent=5 // pred_region
        // Predicated region
        $region25: #{tpu_custom_call.1} parent=23 // pred_check
          %p141 = pneg %p78
        $region26: #{tpu_custom_call.1} parent=23 // pred_check_branch
          %143 = sbr.rel (%p141) target = $region28
        $region27: #{tpu_custom_call.1} parent=23 // pred_region
          %s144 = sand.u32 %s68, 1
          %s145 = scalar_lea.sflag [#allocation3], %s144
          %s146 = sand.u32 %s68, 1
          %s147 = smul.addr %s146, 8
          %s148 = scalar_lea.vmem [#allocation6], %s147
          %s150 = ssub.s32 128, 128
          %151 = vsyncadd %s145, %s150
          %s152 = smul.addr %s16, 2
          %s153 = smul.addr %s152, 64
          %s154 = scalar_lea.hbm %s2, %s153
          %s156 = sshll.u32 %s148, 4
          %s157 = int_to_ptr.vmem [resolvable:$true] %s156
          %159 = dma.hbm_to_vmem [thread:$0]  %s154, 128, %s157, %s145
        $region28: #{tpu_custom_call.1} parent=23 // pred_fallthru
          _
      $region24: #{tpu_custom_call.1} parent=5 // pred_fallthru
        _
      %p160 = scmp.le.s32.totalorder 1, %s16
      %p161 = scmp.lt.s32.totalorder %s16, 3
      %p162 = pnand %p160, %p161
      %p163 = pneg %p162
      // Predicated region
      $region29: #{tpu_custom_call.1} parent=5 // pred_check
        _
      $region30: #{tpu_custom_call.1} parent=5 // pred_check_branch
        %165 = sbr.rel (%p162) target = $region32
      $region31: #{tpu_custom_call.1} parent=5 // pred_region
        %s166 = ssub.s32 %s16, 1
        // Predicated region
        $region33: #{tpu_custom_call.1} parent=31 // pred_check
          %p167 = pneg %p37
        $region34: #{tpu_custom_call.1} parent=31 // pred_check_branch
          %169 = sbr.rel (%p167) target = $region36
        $region35: #{tpu_custom_call.1} parent=31 // pred_region
          %170 = dma.done [#allocation5], 16
        $region36: #{tpu_custom_call.1} parent=31 // pred_fallthru
          _
        %s171 = sand.u32 %s71, 1
        %s172 = scalar_lea.sflag [#allocation3], %s171
        %s173 = sand.u32 %s71, 1
        %s174 = smul.addr %s173, 8
        %s175 = scalar_lea.vmem [#allocation6], %s174
        // Predicated region
        $region37: #{tpu_custom_call.1} parent=31 // pred_check
          %p176 = pneg %p84
        $region38: #{tpu_custom_call.1} parent=31 // pred_check_branch
          %178 = sbr.rel (%p176) target = $region40
        $region39: #{tpu_custom_call.1} parent=31 // pred_region
          %179 = dma.done %s172, 128
        $region40: #{tpu_custom_call.1} parent=31 // pred_fallthru
          _
        %180 = sfence
        %p181 = pneg %p37
        %p182 = pneg %p34
        %p183 = pneg %p58
        %p184 = pneg %p55
        %s185 = sand.u32 %s71, 1
        %s186 = scalar_lea.sflag [#allocation3], %s185
        %s187 = sand.u32 %s71, 1
        %s188 = smul.addr %s187, 8
        %s189 = scalar_lea.vmem [#allocation6], %s188
        %p190 = pneg %p84
        %p191 = pneg %p81
        %p192 = pneg %p110
        %p193 = pneg %p107
        %s194 = sand.u32 %s97, 1
        %s195 = scalar_lea.sflag [#allocation4], %s194
        %s196 = sand.u32 %s97, 1
        %s197 = smul.addr %s196, 8
        %s198 = scalar_lea.vmem [#allocation7], %s197
        %v199 = vld [vmem:[%s175] sm:$0xff]
        %v201 = vcombine.high %v199, %v199
        %vm203 = vcmask 1043456
        %v204 = vsel %vm203, %v199, 0.0
        %v205 = vrot.slane %v204, 4
        %v206 = vadd.f32 %v204, %v205
        %v207 = vrot.slane %v206, 2
        %v208 = vadd.f32 %v206, %v207
        %v209 = vrot.slane %v208, 1
        %v210 = vadd.f32 %v208, %v209
        %v211 = vsel %vm203, %v201, 0.0
        %v212 = vrot.slane %v211, 4
        %v213 = vadd.f32 %v211, %v212
        %v214 = vrot.slane %v213, 2
        %v215 = vadd.f32 %v213, %v214
        %v216 = vrot.slane %v215, 1
        %v217 = vadd.f32 %v215, %v216
        %v218 = vsel %vm203, %v199, -inf
        %v219 = vrot.slane %v218, 4
        %v220 = vmax.f32 %v218, %v219
        %v221 = vrot.slane %v220, 2
        %v222 = vmax.f32 %v220, %v221
        %v223 = vrot.slane %v222, 1
        %v224 = vmax.f32 %v222, %v223
        %v225 = vsel %vm203, %v201, -inf
        %v226 = vrot.slane %v225, 4
        %v227 = vmax.f32 %v225, %v226
        %v228 = vrot.slane %v227, 2
        %v229 = vmax.f32 %v227, %v228
        %v230 = vrot.slane %v229, 1
        %v231 = vmax.f32 %v229, %v230
        %v232 = vld [vmem:[%s1] sm:$0x3]
        %v233 = vlaneseq
        %v234 = vand.u32 %v233, 127
        %v235 = vadd.s32 %v234, 128
        %vm236 = vcmp.eq.s32.totalorder %v232, 0
        %vm237 = vcmp.eq.s32.totalorder %v232, 15
        %vm238 = vcmp.lt.s32.totalorder %v234, 16
        %vm239 = vcmp.lt.s32.totalorder %v235, 16
        %vm240 = vcmp.ge.s32.totalorder %v234, 240
        %vm241 = vcmp.ge.s32.totalorder %v235, 240
        %s242 = sld [smem:[#allocation2 + $0x12]]
        %v243 = vstv %s242
        %244 = vrot.lane.b32.xlu0 %v210, 1
        %v245 = vpop.permute.xlu0 %244
        %246 = vrot.lane.b32.xlu0 %v217, 1
        %v247 = vpop.permute.xlu0 %246
        %vm248 = vcmp.lt.s32.totalorder %v234, 1
        %v249 = vsel %vm248, %v245, %v247
        %v250 = vsel %vm248, %v247, %v245
        %251 = vrot.lane.b32.xlu0 %v210, 127
        %v252 = vpop.permute.xlu0 %251
        %253 = vrot.lane.b32.xlu0 %v217, 127
        %v254 = vpop.permute.xlu0 %253
        %vm255 = vcmp.lt.s32.totalorder %v234, 127
        %v256 = vsel %vm255, %v252, %v254
        %v257 = vsel %vm255, %v254, %v252
        %v260 = vcombine.low %v256, %v257
        %v262 = vunpack.c.l.s4 1966171168
        %v263 = vunpack.c.0.s8 %v262
        %v264 = vlaneseq
        %v265 = vshrl.u32 %v264, 7
        %v266 = vsub.s32 %v263, %v265
        %v267 = vrot.slane %v260, %v266
        %v269 = vunpack.c.l.s4 1966171168
        %v270 = vunpack.c.0.s8 %v269
        %v271 = vlaneseq
        %v272 = vshrl.u32 %v271, 7
        %v273 = vsub.s32 %v270, %v272
        %v274 = vrot.slane %v267, %v273
        %v278 = vcombine.low %v250, %v249
        %v280 = vunpack.c.l.s4 1966171168
        %v281 = vunpack.c.0.s8 %v280
        %v282 = vlaneseq
        %v283 = vshrl.u32 %v282, 7
        %v284 = vsub.s32 %v281, %v283
        %v285 = vrot.slane %v278, %v284
        %v287 = vunpack.c.l.s4 1966171168
        %v288 = vunpack.c.0.s8 %v287
        %v289 = vlaneseq
        %v290 = vshrl.u32 %v289, 7
        %v291 = vsub.s32 %v288, %v290
        %v292 = vrot.slane %v285, %v291
        %v294 = vsel %vm236, %v274, %v292
        %v295 = vsel %vm237, %v292, %v274
        %v297 = vlaneseq
        %v298 = vshrl.u32 %v297, 7
        %v299 = vsub.s32 0, %v298
        %v300 = vrot.slane %v294, %v299
        %v301 = vlaneseq
        %v302 = vshrl.u32 %v301, 7
        %v303 = vsub.s32 1, %v302
        %v304 = vrot.slane %v294, %v303
        %307 = vrot.lane.b32.xlu0 %v300, 16
        %v308 = vpop.permute.xlu0 %307
        %309 = vrot.lane.b32.xlu0 %v304, 16
        %v310 = vpop.permute.xlu0 %309
        %v311 = vsel %vm238, %v308, %v310
        %v312 = vsel %vm238, %v310, %v308
        %313 = vrot.lane.b32.xlu0 %v300, 112
        %v314 = vpop.permute.xlu0 %313
        %315 = vrot.lane.b32.xlu0 %v304, 112
        %v316 = vpop.permute.xlu0 %315
        %vm317 = vcmp.lt.s32.totalorder %v234, 112
        %v318 = vsel %vm317, %v314, %v316
        %v319 = vsel %vm317, %v316, %v314
        %s320 = sld [smem:[#allocation2]]
        %v321 = vsel %vm238, %v318, %v312
        %v322 = vsel %vm239, %v319, %v311
        %v323 = vstv %s320
        %v324 = vmul.f32 %v323, %v321
        %v325 = vmul.f32 %v323, %v322
        %v326 = vadd.f32 %v243, %v324
        %v327 = vadd.f32 %v243, %v325
        %s328 = sld [smem:[#allocation2 + $0x3]]
        %v329 = vstv %s328
        %v330 = vmul.f32 %v329, %v294
        %v332 = vlaneseq
        %v333 = vshrl.u32 %v332, 7
        %v334 = vsub.s32 0, %v333
        %v335 = vrot.slane %v330, %v334
        %v336 = vlaneseq
        %v337 = vshrl.u32 %v336, 7
        %v338 = vsub.s32 1, %v337
        %v339 = vrot.slane %v330, %v338
        %v342 = vadd.f32 %v326, %v335
        %v343 = vadd.f32 %v327, %v339
        %s344 = sld [smem:[#allocation2 + $0x6]]
        %v345 = vsel %vm240, %v312, %v318
        %v346 = vsel %vm241, %v311, %v319
        %v347 = vstv %s344
        %v348 = vmul.f32 %v347, %v345
        %v349 = vmul.f32 %v347, %v346
        %v350 = vadd.f32 %v342, %v348
        %v351 = vadd.f32 %v343, %v349
        %352 = vrot.lane.b32.xlu0 %v210, 16
        %v353 = vpop.permute.xlu0 %352
        %354 = vrot.lane.b32.xlu0 %v217, 16
        %v355 = vpop.permute.xlu0 %354
        %v356 = vsel %vm238, %v353, %v355
        %v357 = vsel %vm238, %v355, %v353
        %358 = vrot.lane.b32.xlu0 %v210, 112
        %v359 = vpop.permute.xlu0 %358
        %360 = vrot.lane.b32.xlu0 %v217, 112
        %v361 = vpop.permute.xlu0 %360
        %v362 = vsel %vm317, %v359, %v361
        %v363 = vsel %vm317, %v361, %v359
        %s364 = sld [smem:[#allocation2 + $0x1]]
        %v365 = vsel %vm238, %v362, %v357
        %v366 = vsel %vm239, %v363, %v356
        %v367 = vstv %s364
        %v368 = vmul.f32 %v367, %v365
        %v369 = vmul.f32 %v367, %v366
        %v370 = vadd.f32 %v350, %v368
        %v371 = vadd.f32 %v351, %v369
        %s372 = sld [smem:[#allocation2 + $0x4]]
        %v373 = vstv %s372
        %v374 = vmul.f32 %v373, %v210
        %v375 = vmul.f32 %v373, %v217
        %v376 = vadd.f32 %v370, %v374
        %v377 = vadd.f32 %v371, %v375
        %s378 = sld [smem:[#allocation2 + $0x7]]
        %v379 = vsel %vm240, %v357, %v362
        %v380 = vsel %vm241, %v356, %v363
        %v381 = vstv %s378
        %v382 = vmul.f32 %v381, %v379
        %v383 = vmul.f32 %v381, %v380
        %v384 = vadd.f32 %v376, %v382
        %v385 = vadd.f32 %v377, %v383
        %v387 = vlaneseq
        %v388 = vshrl.u32 %v387, 7
        %v389 = vsub.s32 0, %v388
        %v390 = vrot.slane %v295, %v389
        %v391 = vlaneseq
        %v392 = vshrl.u32 %v391, 7
        %v393 = vsub.s32 1, %v392
        %v394 = vrot.slane %v295, %v393
        %397 = vrot.lane.b32.xlu0 %v390, 16
        %v398 = vpop.permute.xlu0 %397
        %399 = vrot.lane.b32.xlu0 %v394, 16
        %v400 = vpop.permute.xlu0 %399
        %v401 = vsel %vm238, %v398, %v400
        %v402 = vsel %vm238, %v400, %v398
        %403 = vrot.lane.b32.xlu0 %v390, 112
        %v404 = vpop.permute.xlu0 %403
        %405 = vrot.lane.b32.xlu0 %v394, 112
        %v406 = vpop.permute.xlu0 %405
        %v407 = vsel %vm317, %v404, %v406
        %v408 = vsel %vm317, %v406, %v404
        %s409 = sld [smem:[#allocation2 + $0x2]]
        %v410 = vsel %vm238, %v407, %v402
        %v411 = vsel %vm239, %v408, %v401
        %v412 = vstv %s409
        %v413 = vmul.f32 %v412, %v410
        %v414 = vmul.f32 %v412, %v411
        %v415 = vadd.f32 %v384, %v413
        %v416 = vadd.f32 %v385, %v414
        %s417 = sld [smem:[#allocation2 + $0x5]]
        %v418 = vstv %s417
        %v419 = vmul.f32 %v418, %v295
        %v421 = vlaneseq
        %v422 = vshrl.u32 %v421, 7
        %v423 = vsub.s32 0, %v422
        %v424 = vrot.slane %v419, %v423
        %v425 = vlaneseq
        %v426 = vshrl.u32 %v425, 7
        %v427 = vsub.s32 1, %v426
        %v428 = vrot.slane %v419, %v427
        %v431 = vadd.f32 %v415, %v424
        %v432 = vadd.f32 %v416, %v428
        %s433 = sld [smem:[#allocation2 + $0x8]]
        %v434 = vsel %vm240, %v402, %v407
        %v435 = vsel %vm241, %v401, %v408
        %v436 = vstv %s433
        %v437 = vmul.f32 %v436, %v434
        %v438 = vmul.f32 %v436, %v435
        %v439 = vadd.f32 %v431, %v437
        %v440 = vadd.f32 %v432, %v438
        %441 = vrot.lane.b32.xlu0 %v224, 1
        %v442 = vpop.permute.xlu0 %441
        %443 = vrot.lane.b32.xlu0 %v231, 1
        %v444 = vpop.permute.xlu0 %443
        %v445 = vsel %vm248, %v442, %v444
        %v446 = vsel %vm248, %v444, %v442
        %447 = vrot.lane.b32.xlu0 %v224, 127
        %v448 = vpop.permute.xlu0 %447
        %449 = vrot.lane.b32.xlu0 %v231, 127
        %v450 = vpop.permute.xlu0 %449
        %v451 = vsel %vm255, %v448, %v450
        %v452 = vsel %vm255, %v450, %v448
        %v455 = vcombine.low %v451, %v452
        %v457 = vunpack.c.l.s4 1966171168
        %v458 = vunpack.c.0.s8 %v457
        %v459 = vlaneseq
        %v460 = vshrl.u32 %v459, 7
        %v461 = vsub.s32 %v458, %v460
        %v462 = vrot.slane %v455, %v461
        %v464 = vunpack.c.l.s4 1966171168
        %v465 = vunpack.c.0.s8 %v464
        %v466 = vlaneseq
        %v467 = vshrl.u32 %v466, 7
        %v468 = vsub.s32 %v465, %v467
        %v469 = vrot.slane %v462, %v468
        %v473 = vcombine.low %v446, %v445
        %v475 = vunpack.c.l.s4 1966171168
        %v476 = vunpack.c.0.s8 %v475
        %v477 = vlaneseq
        %v478 = vshrl.u32 %v477, 7
        %v479 = vsub.s32 %v476, %v478
        %v480 = vrot.slane %v473, %v479
        %v482 = vunpack.c.l.s4 1966171168
        %v483 = vunpack.c.0.s8 %v482
        %v484 = vlaneseq
        %v485 = vshrl.u32 %v484, 7
        %v486 = vsub.s32 %v483, %v485
        %v487 = vrot.slane %v480, %v486
        %v489 = vsel %vm236, %v469, %v487
        %v490 = vsel %vm237, %v487, %v469
        %v492 = vlaneseq
        %v493 = vshrl.u32 %v492, 7
        %v494 = vsub.s32 0, %v493
        %v495 = vrot.slane %v489, %v494
        %v496 = vlaneseq
        %v497 = vshrl.u32 %v496, 7
        %v498 = vsub.s32 1, %v497
        %v499 = vrot.slane %v489, %v498
        %502 = vrot.lane.b32.xlu0 %v495, 16
        %v503 = vpop.permute.xlu0 %502
        %504 = vrot.lane.b32.xlu0 %v499, 16
        %v505 = vpop.permute.xlu0 %504
        %v506 = vsel %vm238, %v503, %v505
        %v507 = vsel %vm238, %v505, %v503
        %508 = vrot.lane.b32.xlu0 %v495, 112
        %v509 = vpop.permute.xlu0 %508
        %510 = vrot.lane.b32.xlu0 %v499, 112
        %v511 = vpop.permute.xlu0 %510
        %v512 = vsel %vm317, %v509, %v511
        %v513 = vsel %vm317, %v511, %v509
        %s514 = sld [smem:[#allocation2 + $0x9]]
        %v515 = vsel %vm238, %v512, %v507
        %v516 = vsel %vm239, %v513, %v506
        %v517 = vstv %s514
        %v518 = vmul.f32 %v517, %v515
        %v519 = vmul.f32 %v517, %v516
        %v520 = vadd.f32 %v439, %v518
        %v521 = vadd.f32 %v440, %v519
        %s522 = sld [smem:[#allocation2 + $0xc]]
        %v523 = vstv %s522
        %v524 = vmul.f32 %v523, %v489
        %v526 = vlaneseq
        %v527 = vshrl.u32 %v526, 7
        %v528 = vsub.s32 0, %v527
        %v529 = vrot.slane %v524, %v528
        %v530 = vlaneseq
        %v531 = vshrl.u32 %v530, 7
        %v532 = vsub.s32 1, %v531
        %v533 = vrot.slane %v524, %v532
        %v536 = vadd.f32 %v520, %v529
        %v537 = vadd.f32 %v521, %v533
        %s538 = sld [smem:[#allocation2 + $0xf]]
        %v539 = vsel %vm240, %v507, %v512
        %v540 = vsel %vm241, %v506, %v513
        %v541 = vstv %s538
        %v542 = vmul.f32 %v541, %v539
        %v543 = vmul.f32 %v541, %v540
        %v544 = vadd.f32 %v536, %v542
        %v545 = vadd.f32 %v537, %v543
        %546 = vrot.lane.b32.xlu0 %v224, 16
        %v547 = vpop.permute.xlu0 %546
        %548 = vrot.lane.b32.xlu0 %v231, 16
        %v549 = vpop.permute.xlu0 %548
        %v550 = vsel %vm238, %v547, %v549
        %v551 = vsel %vm238, %v549, %v547
        %552 = vrot.lane.b32.xlu0 %v224, 112
        %v553 = vpop.permute.xlu0 %552
        %554 = vrot.lane.b32.xlu0 %v231, 112
        %v555 = vpop.permute.xlu0 %554
        %v556 = vsel %vm317, %v553, %v555
        %v557 = vsel %vm317, %v555, %v553
        %s558 = sld [smem:[#allocation2 + $0xa]]
        %v559 = vsel %vm238, %v556, %v551
        %v560 = vsel %vm239, %v557, %v550
        %v561 = vstv %s558
        %v562 = vmul.f32 %v561, %v559
        %v563 = vmul.f32 %v561, %v560
        %v564 = vadd.f32 %v544, %v562
        %v565 = vadd.f32 %v545, %v563
        %s566 = sld [smem:[#allocation2 + $0xd]]
        %v567 = vstv %s566
        %v568 = vmul.f32 %v567, %v224
        %v569 = vmul.f32 %v567, %v231
        %v570 = vadd.f32 %v564, %v568
        %v571 = vadd.f32 %v565, %v569
        %s572 = sld [smem:[#allocation2 + $0x10]]
        %v573 = vsel %vm240, %v551, %v556
        %v574 = vsel %vm241, %v550, %v557
        %v575 = vstv %s572
        %v576 = vmul.f32 %v575, %v573
        %v577 = vmul.f32 %v575, %v574
        %v578 = vadd.f32 %v570, %v576
        %v579 = vadd.f32 %v571, %v577
        %v581 = vlaneseq
        %v582 = vshrl.u32 %v581, 7
        %v583 = vsub.s32 0, %v582
        %v584 = vrot.slane %v490, %v583
        %v585 = vlaneseq
        %v586 = vshrl.u32 %v585, 7
        %v587 = vsub.s32 1, %v586
        %v588 = vrot.slane %v490, %v587
        %591 = vrot.lane.b32.xlu0 %v584, 16
        %v592 = vpop.permute.xlu0 %591
        %593 = vrot.lane.b32.xlu0 %v588, 16
        %v594 = vpop.permute.xlu0 %593
        %v595 = vsel %vm238, %v592, %v594
        %v596 = vsel %vm238, %v594, %v592
        %597 = vrot.lane.b32.xlu0 %v584, 112
        %v598 = vpop.permute.xlu0 %597
        %599 = vrot.lane.b32.xlu0 %v588, 112
        %v600 = vpop.permute.xlu0 %599
        %v601 = vsel %vm317, %v598, %v600
        %v602 = vsel %vm317, %v600, %v598
        %s603 = sld [smem:[#allocation2 + $0xb]]
        %v604 = vsel %vm238, %v601, %v596
        %v605 = vsel %vm239, %v602, %v595
        %v606 = vstv %s603
        %v607 = vmul.f32 %v606, %v604
        %v608 = vmul.f32 %v606, %v605
        %v609 = vadd.f32 %v578, %v607
        %v610 = vadd.f32 %v579, %v608
        %s611 = sld [smem:[#allocation2 + $0xe]]
        %v612 = vstv %s611
        %v613 = vmul.f32 %v612, %v490
        %v615 = vlaneseq
        %v616 = vshrl.u32 %v615, 7
        %v617 = vsub.s32 0, %v616
        %v618 = vrot.slane %v613, %v617
        %v619 = vlaneseq
        %v620 = vshrl.u32 %v619, 7
        %v621 = vsub.s32 1, %v620
        %v622 = vrot.slane %v613, %v621
        %v625 = vadd.f32 %v609, %v618
        %v626 = vadd.f32 %v610, %v622
        %s627 = sld [smem:[#allocation2 + $0x11]]
        %v628 = vsel %vm240, %v596, %v601
        %v629 = vsel %vm241, %v595, %v602
        %v630 = vstv %s627
        %v631 = vmul.f32 %v630, %v628
        %v632 = vmul.f32 %v630, %v629
        %v633 = vadd.f32 %v625, %v631
        %v634 = vadd.f32 %v626, %v632
        %v635 = vxor.u32 %v633, 2147483648
        %v636 = vxor.u32 %v634, 2147483648
        %v637 = vmul.f32 %v635, 1.442695
        %v638 = vpow.pop %v637
        %v639 = vmul.f32 %v636, 1.442695
        %v640 = vpow.pop %v639
        %v641 = vadd.f32 %v638, 1.0
        %v642 = vadd.f32 %v640, 1.0
        %v643 = vrcp.pop %v641
        %v644 = vmul.f32 1.0, %v643
        %v645 = vrcp.pop %v642
        %v646 = vmul.f32 1.0, %v645
        %v647 = vlaneseq
        %v648 = vshrl.u32 %v647, 7
        %v649 = vsub.s32 0, %v648
        %v650 = vrot.slane %v644, %v649
        %v651 = vlaneseq
        %v652 = vshrl.u32 %v651, 7
        %v653 = vsub.s32 0, %v652
        %v654 = vrot.slane %v646, %v653
        %v657 = vcombine.low %v650, %v654
        %v659 = vmul.f32 %v199, %v657
        %660 = vst [vmem:[%s198] sm:$0xff] %v659
        %s661 = sand.u32 %s97, 1
        %s662 = scalar_lea.sflag [#allocation4], %s661
        %s663 = sand.u32 %s97, 1
        %s664 = smul.addr %s663, 8
        %s665 = scalar_lea.vmem [#allocation7], %s664
        // Predicated region
        $region41: #{tpu_custom_call.1} parent=31 // pred_check
          %p666 = pneg %p107
        $region42: #{tpu_custom_call.1} parent=31 // pred_check_branch
          %668 = sbr.rel (%p666) target = $region44
        $region43: #{tpu_custom_call.1} parent=31 // pred_region
          %s670 = ssub.s32 128, 128
          %671 = vsyncadd %s662, %s670
          %s672 = smul.addr %s21, 2
          %s673 = smul.addr %s672, 64
          %s674 = scalar_lea.hbm %s3, %s673
          %s676 = sshll.u32 %s665, 4
          %s677 = int_to_ptr.vmem [resolvable:$true] %s676
          %679 = dma.vmem_to_hbm [thread:$0]  %s677, 128, %s674, %s662
        $region44: #{tpu_custom_call.1} parent=31 // pred_fallthru
          _
      $region32: #{tpu_custom_call.1} parent=5 // pred_fallthru
        _
      %p680 = scmp.le.s32.totalorder 2, %s16
      // Predicated region
      $region45: #{tpu_custom_call.1} parent=5 // pred_check
        %p681 = pneg %p680
      $region46: #{tpu_custom_call.1} parent=5 // pred_check_branch
        %683 = sbr.rel (%p681) target = $region48
      $region47: #{tpu_custom_call.1} parent=5 // pred_region
        %s684 = ssub.s32 %s16, 2
        // Predicated region
        $region49: #{tpu_custom_call.1} parent=47 // pred_check
          %p685 = pneg %p113
        $region50: #{tpu_custom_call.1} parent=47 // pred_check_branch
          %687 = sbr.rel (%p685) target = $region52
        $region51: #{tpu_custom_call.1} parent=47 // pred_region
          %s688 = sand.u32 %s98, 1
          %s689 = scalar_lea.sflag [#allocation4], %s688
          %s690 = sand.u32 %s98, 1
          %s691 = smul.addr %s690, 8
          %s692 = scalar_lea.vmem [#allocation7], %s691
          %693 = dma.done %s689, 128
        $region52: #{tpu_custom_call.1} parent=47 // pred_fallthru
          _
      $region48: #{tpu_custom_call.1} parent=5 // pred_fallthru
        _
    $region6: #{tpu_custom_call.1} parent=1 // loop_footer
      %s20 = sadd.s32 1, %s16
    $region7: #{tpu_custom_call.1} parent=1 // loop_footer_branch
      %15 = sbr.rel target = $region3
    $region8: #{tpu_custom_call.1} parent=1 // loop_exit
      _
    %694 = vsyncpa [#allocation3], 1
    %s695 = scalar_lea.sflag [#allocation3], 1
    %696 = vsyncpa %s695, 1
    %697 = vsyncpa [#allocation4], 1
    %s698 = scalar_lea.sflag [#allocation4], 1
    %699 = vsyncpa %s698, 1
    %700 = vsyncpa [#allocation5], 1
    %s701 = scalar_lea.sflag [#allocation5], 1
    %702 = vsyncpa %s701, 1

</llo_original>
